<compile_context>
chip_gen: v6e
topology: v6e:2x2x1
jax: 0.10.0
libtpu: 0.0.40
codegen_flags: <defaults>
</compile_context>

<pallas_src>
import math

import jax
import jax.numpy as jnp
from jax.experimental import pallas as pl
from jax.experimental.pallas import tpu as pltpu

_LOG_2PI = math.log(2.0 * math.pi)
_LANES = 128
_SUBLANES = 8


def _nf_forward_kernel(x_ref, ls_ref, sh_ref, z_ref, prior_ref):
    """One batch tile.

    x_ref / z_ref / prior_ref : (TR, 128)  lane-dense flattened (batch, feature)
    ls_ref / sh_ref           : (K, 128)   per-flow params replicated to lane width
    """
    ls = ls_ref[...].astype(jnp.float32)          # (K, 128)
    sh = sh_ref[...].astype(jnp.float32)          # (K, 128)
    num_flows = ls.shape[0]

    # Fold the K x-independent affine maps into a single effective scale `a`
    # and shift `b` (tiny (1,128) rows) -- exact algebra, one pass over x.
    a = jnp.ones((1, ls.shape[1]), dtype=jnp.float32)
    b = jnp.zeros((1, ls.shape[1]), dtype=jnp.float32)
    for k in range(num_flows):                    # K is small & static -> unrolled
        s = jnp.exp(ls[k:k + 1, :])               # (1, 128)
        a = a * s
        b = b * s + sh[k:k + 1, :]

    x = x_ref[...].astype(jnp.float32)            # (TR, 128)
    z = x * a + b                                 # single fused affine pass
    z_ref[...] = z.astype(z_ref.dtype)
    # Standard Normal log-prob, elementwise (torch Normal(0,1).log_prob).
    prior_ref[...] = (-0.5 * (z * z) - 0.5 * _LOG_2PI).astype(prior_ref.dtype)


def normalizing_flow_forward(x, log_scales, shifts, *, block_rows=512):
    """x: (B, D) f32; log_scales, shifts: (K, D) f32.

    Returns (z, prior_logprob, log_det) with shapes (B, D), (B, D), (B,).
    """
    B, D = x.shape
    K = log_scales.shape[0]
    if _LANES % D != 0:
        # TODO(synk): general D that does not divide 128 would need a padded
        # feature layout; flow1d uses D in {1, 2} so this path is not needed.
        raise NotImplementedError("feature dim must divide 128 for lane-dense layout")

    reps = _LANES // D
    # Tiny per-flow lane patterns: ls_pat[k, l] = log_scales[k, l % D].
    ls_pat = jnp.tile(log_scales.astype(jnp.float32), (1, reps))   # (K, 128)
    sh_pat = jnp.tile(shifts.astype(jnp.float32), (1, reps))       # (K, 128)

    # Flatten (B, D) row-major into a lane-dense (R, 128) slab (free reshape;
    # lane l always holds feature l % D since D | 128).
    n = B * D
    r_raw = pl.cdiv(n, _LANES)
    if r_raw <= block_rows:
        tr = r_raw                       # single full-extent block
        r = r_raw
    else:
        assert block_rows % _SUBLANES == 0
        tr = block_rows                  # sublane-aligned batch tile
        r = pl.cdiv(r_raw, tr) * tr
    n_pad = r * _LANES
    x_flat = jnp.pad(x.reshape(-1), (0, n_pad - n)).reshape(r, _LANES)

    grid = (r // tr,)
    z_flat, prior_flat = pl.pallas_call(
        _nf_forward_kernel,
        out_shape=(
            jax.ShapeDtypeStruct((r, _LANES), jnp.float32),   # z
            jax.ShapeDtypeStruct((r, _LANES), jnp.float32),   # prior_logprob
        ),
        grid=grid,
        in_specs=[
            pl.BlockSpec((tr, _LANES), lambda i: (i, 0)),     # x tile (streamed)
            pl.BlockSpec((K, _LANES), lambda i: (0, 0)),      # params stay resident
            pl.BlockSpec((K, _LANES), lambda i: (0, 0)),
        ],
        out_specs=(
            pl.BlockSpec((tr, _LANES), lambda i: (i, 0)),
            pl.BlockSpec((tr, _LANES), lambda i: (i, 0)),
        ),
        compiler_params=pltpu.CompilerParams(
            dimension_semantics=("parallel",),                # shards over v7x's 2 TCs
        ),
    )(x_flat, ls_pat, sh_pat)

    z = z_flat.reshape(-1)[:n].reshape(B, D)
    prior_lp = prior_flat.reshape(-1)[:n].reshape(B, D)
    # log|det J| is independent of x: same scalar for every sample.
    log_det = jnp.full((B,), jnp.sum(log_scales.astype(jnp.float32)),
                       dtype=jnp.float32)
    return z, prior_lp, log_det


def reference_forward(x, log_scales, shifts):
    """Pure-JAX reference mirroring the PyTorch module semantics."""
    B = x.shape[0]
    log_det = jnp.zeros((B,), jnp.float32)
    for k in range(log_scales.shape[0]):
        x = x * jnp.exp(log_scales[k])[None, :] + shifts[k][None, :]
        log_det = log_det + jnp.sum(log_scales[k])
    prior_lp = -0.5 * x * x - 0.5 * math.log(2.0 * math.pi)
    return x, prior_lp, log_det


if __name__ == "__main__":
    key = jax.random.PRNGKey(0)
    kx, ks, kt = jax.random.split(key, 3)

    B, D, K = 2048, 2, 4       # batch, data dim (flow1d -> small D), num flows
    x = jax.random.normal(kx, (B, D), dtype=jnp.float32)
    # Deterministic synthetic flow parameters (what each AffineFlow holds):
    # per-dimension log_scale and shift.
    log_scales = 0.1 * jax.random.normal(ks, (K, D), dtype=jnp.float32)
    shifts = 0.1 * jax.random.normal(kt, (K, D), dtype=jnp.float32)

    z_r, prior_r, ld_r = reference_forward(x, log_scales, shifts)

    # Default path (single resident block at this small size).
    z, prior_lp, log_det = normalizing_flow_forward(x, log_scales, shifts)
    jax.block_until_ready((z, prior_lp, log_det))
    assert z.shape == (B, D) and prior_lp.shape == (B, D) and log_det.shape == (B,)
    assert jnp.allclose(z, z_r, atol=1e-5)
    assert jnp.allclose(prior_lp, prior_r, atol=1e-5)
    assert jnp.allclose(log_det, ld_r, atol=1e-5)

    # Also exercise the multi-step pipelined grid path with small tiles.
    z2, prior2, ld2 = normalizing_flow_forward(x, log_scales, shifts, block_rows=8)
    jax.block_until_ready((z2, prior2, ld2))
    assert jnp.allclose(z2, z_r, atol=1e-5)
    assert jnp.allclose(prior2, prior_r, atol=1e-5)
    assert jnp.allclose(ld2, ld_r, atol=1e-5)

    # And the padded path (B*D not a multiple of 128).
    B3 = 100
    x3 = jax.random.normal(kx, (B3, D), dtype=jnp.float32)
    z3, prior3, ld3 = normalizing_flow_forward(x3, log_scales, shifts)
    jax.block_until_ready((z3, prior3, ld3))
    z3_r, prior3_r, ld3_r = reference_forward(x3, log_scales, shifts)
    assert jnp.allclose(z3, z3_r, atol=1e-5)
    assert jnp.allclose(prior3, prior3_r, atol=1e-5)
    assert jnp.allclose(ld3, ld3_r, atol=1e-5)

    print("KERNEL_OK")
</pallas_src>

<mosaic_0001>
module attributes {stable_mosaic.version = 11 : i64} {
  func.func @_nf_forward_kernel(%arg0: i32, %arg1: memref<32x128xf32, #tpu.memory_space<vmem>>, %arg2: memref<4x128xf32, #tpu.memory_space<vmem>>, %arg3: memref<4x128xf32, #tpu.memory_space<vmem>>, %arg4: memref<32x128xf32, #tpu.memory_space<vmem>>, %arg5: memref<32x128xf32, #tpu.memory_space<vmem>>) attributes {dimension_semantics = [#tpu.dimension_semantics<parallel>], iteration_bounds = array<i64: 1>, scalar_prefetch = 0 : i64, scratch_operands = 0 : i64, tpu.core_type = #tpu.core_type<tc>, window_params = [{transform_indices = @transform_0, window_bounds = array<i64: 32, 128>}, {pipeline_mode = #tpu.pipeline_mode<synchronous>, transform_indices = @transform_1, window_bounds = array<i64: 4, 128>}, {pipeline_mode = #tpu.pipeline_mode<synchronous>, transform_indices = @transform_2, window_bounds = array<i64: 4, 128>}, {transform_indices = @transform_3, window_bounds = array<i64: 32, 128>}, {transform_indices = @transform_4, window_bounds = array<i64: 32, 128>}]} {
    %c0 = arith.constant 0 : index
    %c0_0 = arith.constant 0 : index
    %0 = vector.load %arg2[%c0, %c0_0] : memref<4x128xf32, #tpu.memory_space<vmem>>, vector<4x128xf32>
    %c0_1 = arith.constant 0 : index
    %c0_2 = arith.constant 0 : index
    %1 = vector.load %arg3[%c0_1, %c0_2] : memref<4x128xf32, #tpu.memory_space<vmem>>, vector<4x128xf32>
    %cst = arith.constant 1.000000e+00 : f32
    %2 = vector.broadcast %cst : f32 to vector<1x128xf32>
    %cst_3 = arith.constant 0.000000e+00 : f32
    %3 = vector.broadcast %cst_3 : f32 to vector<1x128xf32>
    %4 = vector.extract_strided_slice %0 {offsets = [0, 0], sizes = [1, 128], strides = [1, 1]} : vector<4x128xf32> to vector<1x128xf32>
    %5 = math.exp %4 : vector<1x128xf32>
    %6 = arith.mulf %2, %5 : vector<1x128xf32>
    %7 = arith.mulf %3, %5 : vector<1x128xf32>
    %8 = vector.extract_strided_slice %1 {offsets = [0, 0], sizes = [1, 128], strides = [1, 1]} : vector<4x128xf32> to vector<1x128xf32>
    %9 = arith.addf %7, %8 : vector<1x128xf32>
    %10 = vector.extract_strided_slice %0 {offsets = [1, 0], sizes = [1, 128], strides = [1, 1]} : vector<4x128xf32> to vector<1x128xf32>
    %11 = math.exp %10 : vector<1x128xf32>
    %12 = arith.mulf %6, %11 : vector<1x128xf32>
    %13 = arith.mulf %9, %11 : vector<1x128xf32>
    %14 = vector.extract_strided_slice %1 {offsets = [1, 0], sizes = [1, 128], strides = [1, 1]} : vector<4x128xf32> to vector<1x128xf32>
    %15 = arith.addf %13, %14 : vector<1x128xf32>
    %16 = vector.extract_strided_slice %0 {offsets = [2, 0], sizes = [1, 128], strides = [1, 1]} : vector<4x128xf32> to vector<1x128xf32>
    %17 = math.exp %16 : vector<1x128xf32>
    %18 = arith.mulf %12, %17 : vector<1x128xf32>
    %19 = arith.mulf %15, %17 : vector<1x128xf32>
    %20 = vector.extract_strided_slice %1 {offsets = [2, 0], sizes = [1, 128], strides = [1, 1]} : vector<4x128xf32> to vector<1x128xf32>
    %21 = arith.addf %19, %20 : vector<1x128xf32>
    %22 = vector.extract_strided_slice %0 {offsets = [3, 0], sizes = [1, 128], strides = [1, 1]} : vector<4x128xf32> to vector<1x128xf32>
    %23 = math.exp %22 : vector<1x128xf32>
    %24 = arith.mulf %18, %23 : vector<1x128xf32>
    %25 = arith.mulf %21, %23 : vector<1x128xf32>
    %26 = vector.extract_strided_slice %1 {offsets = [3, 0], sizes = [1, 128], strides = [1, 1]} : vector<4x128xf32> to vector<1x128xf32>
    %27 = arith.addf %25, %26 : vector<1x128xf32>
    %c0_4 = arith.constant 0 : index
    %c0_5 = arith.constant 0 : index
    %28 = vector.load %arg1[%c0_4, %c0_5] : memref<32x128xf32, #tpu.memory_space<vmem>>, vector<32x128xf32>
    %29 = vector.broadcast %24 : vector<1x128xf32> to vector<32x128xf32>
    %30 = arith.mulf %28, %29 : vector<32x128xf32>
    %31 = vector.broadcast %27 : vector<1x128xf32> to vector<32x128xf32>
    %32 = arith.addf %30, %31 : vector<32x128xf32>
    %c0_6 = arith.constant 0 : index
    %c0_7 = arith.constant 0 : index
    %33 = vector.load %arg4[%c0_6, %c0_7] : memref<32x128xf32, #tpu.memory_space<vmem>>, vector<32x128xf32>
    tpu.vector_store %arg4[%c0_6, %c0_7], %32 {strides = array<i32>} : memref<32x128xf32, #tpu.memory_space<vmem>>, vector<32x128xf32>,
    %34 = arith.mulf %32, %32 : vector<32x128xf32>
    %cst_8 = arith.constant -5.000000e-01 : f32
    %35 = vector.broadcast %cst_8 : f32 to vector<32x128xf32>
    %36 = arith.mulf %35, %34 : vector<32x128xf32>
    %cst_9 = arith.constant 0.918938517 : f32
    %37 = vector.broadcast %cst_9 : f32 to vector<32x128xf32>
    %38 = arith.subf %36, %37 : vector<32x128xf32>
    %c0_10 = arith.constant 0 : index
    %c0_11 = arith.constant 0 : index
    %39 = vector.load %arg5[%c0_10, %c0_11] : memref<32x128xf32, #tpu.memory_space<vmem>>, vector<32x128xf32>
    tpu.vector_store %arg5[%c0_10, %c0_11], %38 {strides = array<i32>} : memref<32x128xf32, #tpu.memory_space<vmem>>, vector<32x128xf32>,
    return
  }
  func.func @transform_0(%arg0: i32) -> (i32, i32) {
    %c0_i32 = arith.constant 0 : i32
    %c0_i32_0 = arith.constant 0 : i32
    return %arg0, %c0_i32 : i32, i32
  }
  func.func @transform_1(%arg0: i32) -> (i32, i32) {
    %c0_i32 = arith.constant 0 : i32
    %c0_i32_0 = arith.constant 0 : i32
    %c0_i32_1 = arith.constant 0 : i32
    return %c0_i32, %c0_i32_0 : i32, i32
  }
  func.func @transform_2(%arg0: i32) -> (i32, i32) {
    %c0_i32 = arith.constant 0 : i32
    %c0_i32_0 = arith.constant 0 : i32
    %c0_i32_1 = arith.constant 0 : i32
    return %c0_i32, %c0_i32_0 : i32, i32
  }
  func.func @transform_3(%arg0: i32) -> (i32, i32) {
    %c0_i32 = arith.constant 0 : i32
    %c0_i32_0 = arith.constant 0 : i32
    return %arg0, %c0_i32 : i32, i32
  }
  func.func @transform_4(%arg0: i32) -> (i32, i32) {
    %c0_i32 = arith.constant 0 : i32
    %c0_i32_0 = arith.constant 0 : i32
    return %arg0, %c0_i32 : i32, i32
  }
}

</mosaic_0001>

<llo_original>
// kernel: tpu_custom_call.1
$region0: #{tpu_custom_call.1}
  #allocation0 [shape = 'u32[]', space=smem, size = 0x4, offset = 0x4, fixed_abs, tag = 'smem constant byte address 0x4 - core index']
  #allocation1 [shape = 'u32[144,128]{1,0:T(1,128)}', space=vmem, size = 0x12000, scoped, tag = 'internal scratch']
  %s0 = inlined_call_operand.hbm [shape: f32[32,128], index: 0, kind: input, shape index: {}]
  %s1 = inlined_call_operand.hbm [shape: f32[4,128], index: 1, kind: input, shape index: {}]
  %s2 = inlined_call_operand.hbm [shape: f32[4,128], index: 2, kind: input, shape index: {}]
  %s3 = inlined_call_operand.hbm [shape: f32[32,128], index: 3, kind: output, shape index: {0}]
  %s4 = inlined_call_operand.hbm [shape: f32[32,128], index: 4, kind: output, shape index: {1}]
  %5 = xla_tuple %s3, %s4
  %s6 = sld [smem:[#allocation0]]
  $region42: #{tpu_custom_call.1} parent=0
    _
  %s8 = ssub.s32 1, %s6
  %s9 = scalar_select 0, %s8, %s6
  $region1: #{tpu_custom_call.1} parent=0
    #allocation2 [shape = 'u8[16384]{0}', space=vmem, size = 0x4000, scoped, tag = 'input window, operand 0, single buffered']
    #allocation3 [shape = 's32[1]{0}', space=sflag, size = 0x4, scoped, tag = 'scoped memory for tpu_custom_call.1']
    #allocation4 [shape = 's32[1]{0}', space=sflag, size = 0x4, scoped, tag = 'scoped memory for tpu_custom_call.1']
    #allocation5 [shape = 'u8[2048]{0}', space=vmem, size = 0x800, scoped, tag = 'input window, operand 1, single buffered']
    #allocation6 [shape = 's32[1]{0}', space=sflag, size = 0x4, scoped, tag = 'scoped memory for tpu_custom_call.1']
    #allocation7 [shape = 'u8[2048]{0}', space=vmem, size = 0x800, scoped, tag = 'input window, operand 2, single buffered']
    #allocation8 [shape = 'u8[16384]{0}', space=vmem, size = 0x4000, scoped, tag = 'output window, operand 0, single buffered']
    #allocation9 [shape = 'u8[16384]{0}', space=vmem, size = 0x4000, scoped, tag = 'output window, operand 1, single buffered']
    #allocation10 [shape = 's32[1]{0}', space=sflag, size = 0x4, scoped, tag = 'scoped memory for tpu_custom_call.1']
    %10 = vsyncpa [#allocation3], 0
    %11 = vsyncpa [#allocation6], 0
    %12 = vsyncpa [#allocation4], 0
    %13 = vsyncpa [#allocation10], 0
    // Predicated region
    $region2: #{tpu_custom_call.1} parent=1 // pred_check
      _
    $region3: #{tpu_custom_call.1} parent=1 // pred_check_branch
      %15 = sbr.rel (0) target = $region5
    $region4: #{tpu_custom_call.1} parent=1 // pred_region
      %s17 = ssub.s32 512, 512
      %18 = vsyncadd [#allocation3], %s17
      %s19 = sshll.u32 [#allocation2], 4
      %s20 = int_to_ptr.vmem [resolvable:$true] %s19
      %25 = dma.hbm_to_vmem [thread:$0]  %s0, 512, %s20, [#allocation3], 128, 128, 8
    $region5: #{tpu_custom_call.1} parent=1 // pred_fallthru
      _
    // Predicated region
    $region6: #{tpu_custom_call.1} parent=1 // pred_check
      _
    $region7: #{tpu_custom_call.1} parent=1 // pred_check_branch
      %27 = sbr.rel (0) target = $region9
    $region8: #{tpu_custom_call.1} parent=1 // pred_region
      %s29 = ssub.s32 64, 64
      %30 = vsyncadd [#allocation6], %s29
      %s32 = sshll.u32 [#allocation5], 4
      %s33 = int_to_ptr.vmem [resolvable:$true] %s32
      %35 = dma.hbm_to_vmem [thread:$0]  %s1, 64, %s33, [#allocation6]
    $region9: #{tpu_custom_call.1} parent=1 // pred_fallthru
      _
    // Predicated region
    $region10: #{tpu_custom_call.1} parent=1 // pred_check
      _
    $region11: #{tpu_custom_call.1} parent=1 // pred_check_branch
      %37 = sbr.rel (0) target = $region13
    $region12: #{tpu_custom_call.1} parent=1 // pred_region
      %s39 = ssub.s32 64, 64
      %40 = vsyncadd [#allocation6], %s39
      %s42 = sshll.u32 [#allocation7], 4
      %s43 = int_to_ptr.vmem [resolvable:$true] %s42
      %45 = dma.hbm_to_vmem [thread:$0]  %s2, 64, %s43, [#allocation6]
    $region13: #{tpu_custom_call.1} parent=1 // pred_fallthru
      _
    // Predicated region
    $region14: #{tpu_custom_call.1} parent=1 // pred_check
      _
    $region15: #{tpu_custom_call.1} parent=1 // pred_check_branch
      %47 = sbr.rel (0) target = $region17
    $region16: #{tpu_custom_call.1} parent=1 // pred_region
      %48 = dma.done [#allocation3], 512
    $region17: #{tpu_custom_call.1} parent=1 // pred_fallthru
      _
    // Predicated region
    $region18: #{tpu_custom_call.1} parent=1 // pred_check
      _
    $region19: #{tpu_custom_call.1} parent=1 // pred_check_branch
      %50 = sbr.rel (0) target = $region21
    $region20: #{tpu_custom_call.1} parent=1 // pred_region
      %51 = dma.done [#allocation6], 64
    $region21: #{tpu_custom_call.1} parent=1 // pred_fallthru
      _
    // Predicated region
    $region22: #{tpu_custom_call.1} parent=1 // pred_check
      _
    $region23: #{tpu_custom_call.1} parent=1 // pred_check_branch
      %53 = sbr.rel (0) target = $region25
    $region24: #{tpu_custom_call.1} parent=1 // pred_region
      %54 = dma.done [#allocation6], 64
    $region25: #{tpu_custom_call.1} parent=1 // pred_fallthru
      _
    %v55 = vld [vmem:[#allocation5] sm:$0xf]
    %v56 = vld [vmem:[#allocation7] sm:$0xf]
    %v57 = vmul.f32 %v55, 1.442695
    %v58 = vpow.pop %v57
    %v59 = vmul.f32 %v58, 0.0
    %v60 = vadd.f32 %v59, %v56
    %v62 = vrot.slane %v58, 1
    %v64 = vmul.f32 %v58, %v62
    %v65 = vmul.f32 %v60, %v62
    %v67 = vrot.slane %v56, 1
    %v69 = vadd.f32 %v65, %v67
    %v70 = vrot.slane %v58, 2
    %v72 = vmul.f32 %v64, %v70
    %v73 = vmul.f32 %v69, %v70
    %v74 = vrot.slane %v56, 2
    %v76 = vadd.f32 %v73, %v74
    %v77 = vrot.slane %v58, 3
    %v79 = vmul.f32 %v72, %v77
    %v80 = vmul.f32 %v76, %v77
    %v81 = vrot.slane %v56, 3
    %v83 = vadd.f32 %v80, %v81
    %v84 = vld [vmem:[#allocation2] sm:$0xff]
    %v85 = vld [vmem:[#allocation2 + $0x8] sm:$0xff]
    %v86 = vld [vmem:[#allocation2 + $0x10] sm:$0xff]
    %v87 = vld [vmem:[#allocation2 + $0x18] sm:$0xff]
    %v88 = vlaneseq
    %v89 = vshrl.u32 %v88, 7
    %v90 = vsub.s32 0, %v89
    %v91 = vrot.slane %v79, %v90
    %v92 = vmul.f32 %v84, %v91
    %v93 = vmul.f32 %v85, %v91
    %v94 = vmul.f32 %v86, %v91
    %v95 = vmul.f32 %v87, %v91
    %v96 = vlaneseq
    %v97 = vshrl.u32 %v96, 7
    %v98 = vsub.s32 0, %v97
    %v99 = vrot.slane %v83, %v98
    %v100 = vadd.f32 %v92, %v99
    %v101 = vadd.f32 %v93, %v99
    %v102 = vadd.f32 %v94, %v99
    %v103 = vadd.f32 %v95, %v99
    %104 = vst [vmem:[#allocation8] sm:$0xff] %v100
    %105 = vst [vmem:[#allocation8 + $0x8] sm:$0xff] %v101
    %106 = vst [vmem:[#allocation8 + $0x10] sm:$0xff] %v102
    %107 = vst [vmem:[#allocation8 + $0x18] sm:$0xff] %v103
    %v108 = vmul.f32 %v100, %v100
    %v109 = vmul.f32 %v101, %v101
    %v110 = vmul.f32 %v102, %v102
    %v111 = vmul.f32 %v103, %v103
    %v112 = vmul.f32 %v108, -0.5
    %v113 = vmul.f32 %v109, -0.5
    %v114 = vmul.f32 %v110, -0.5
    %v115 = vmul.f32 %v111, -0.5
    %v116 = vsub.f32 %v112, 0.9189385
    %v117 = vsub.f32 %v113, 0.9189385
    %v118 = vsub.f32 %v114, 0.9189385
    %v119 = vsub.f32 %v115, 0.9189385
    %120 = vst [vmem:[#allocation9] sm:$0xff] %v116
    %121 = vst [vmem:[#allocation9 + $0x8] sm:$0xff] %v117
    %122 = vst [vmem:[#allocation9 + $0x10] sm:$0xff] %v118
    %123 = vst [vmem:[#allocation9 + $0x18] sm:$0xff] %v119
    // Predicated region
    $region26: #{tpu_custom_call.1} parent=1 // pred_check
      _
    $region27: #{tpu_custom_call.1} parent=1 // pred_check_branch
      %125 = sbr.rel (0) target = $region29
    $region28: #{tpu_custom_call.1} parent=1 // pred_region
      %s127 = ssub.s32 512, 512
      %128 = vsyncadd [#allocation4], %s127
      %s129 = sshll.u32 [#allocation8], 4
      %s130 = int_to_ptr.vmem [resolvable:$true] %s129
      %135 = dma.vmem_to_hbm [thread:$0]  %s130, 512, %s3, [#allocation4], 128, 128, 8
    $region29: #{tpu_custom_call.1} parent=1 // pred_fallthru
      _
    // Predicated region
    $region30: #{tpu_custom_call.1} parent=1 // pred_check
      _
    $region31: #{tpu_custom_call.1} parent=1 // pred_check_branch
      %137 = sbr.rel (0) target = $region33
    $region32: #{tpu_custom_call.1} parent=1 // pred_region
      %s139 = ssub.s32 512, 512
      %140 = vsyncadd [#allocation10], %s139
      %s141 = sshll.u32 [#allocation9], 4
      %s142 = int_to_ptr.vmem [resolvable:$true] %s141
      %147 = dma.vmem_to_hbm [thread:$0]  %s142, 512, %s4, [#allocation10], 128, 128, 8
    $region33: #{tpu_custom_call.1} parent=1 // pred_fallthru
      _
    // Predicated region
    $region34: #{tpu_custom_call.1} parent=1 // pred_check
      _
    $region35: #{tpu_custom_call.1} parent=1 // pred_check_branch
      %149 = sbr.rel (0) target = $region37
    $region36: #{tpu_custom_call.1} parent=1 // pred_region
      %150 = dma.done [#allocation4], 512
    $region37: #{tpu_custom_call.1} parent=1 // pred_fallthru
      _
    // Predicated region
    $region38: #{tpu_custom_call.1} parent=1 // pred_check
      _
    $region39: #{tpu_custom_call.1} parent=1 // pred_check_branch
      %152 = sbr.rel (0) target = $region41
    $region40: #{tpu_custom_call.1} parent=1 // pred_region
      %153 = dma.done [#allocation10], 512
    $region41: #{tpu_custom_call.1} parent=1 // pred_fallthru
      _
    %154 = vsyncpa [#allocation3], 1
    %155 = vsyncpa [#allocation6], 1
    %156 = vsyncpa [#allocation4], 1
    %157 = vsyncpa [#allocation10], 1

</llo_original>
